<compile_context>
chip_gen: v5e
topology: v5e:2x2
jax: 0.10.0
libtpu: 0.0.40
codegen_flags: <defaults>
</compile_context>

<pallas_src>
import functools

import jax
import jax.numpy as jnp
from jax import lax
from jax.experimental import pallas as pl
from jax.experimental.pallas import tpu as pltpu

EPS = 1e-6

# Fully unroll the LayerNorm chain up to this many layers; beyond that use a
# fori_loop so code size / live ranges stay bounded.
_UNROLL_MAX_LAYERS = 8


def _encoder_kernel(x_ref, gain_ref, bias_ref, o_ref, *, d_true, d_pad, n_chain):
    # x_ref:    (TR, Dp)  tile of rows (lane dim padded to a multiple of 128
    #                      only when D % 128 != 0)
    # gain_ref: (L,  Dp)  stacked per-layer gains  (L = n_layers + 1), resident
    # bias_ref: (L,  Dp)  stacked per-layer biases, resident
    x = x_ref[...].astype(jnp.float32)

    inv_n = 1.0 / d_true
    # Unbiased variance divides by (d_true - 1); d_true >= 2 is enforced in
    # the wrapper (torch.std of a single element is NaN anyway).
    inv_nm1 = 1.0 / (d_true - 1)
    pad_lanes = float(d_pad - d_true)

    def one_layer(x, g, b):
        g = g.astype(jnp.float32)
        b = b.astype(jnp.float32)
        mean = jnp.sum(x, axis=-1, keepdims=True) * inv_n
        centered = x - mean
        sq = jnp.sum(centered * centered, axis=-1, keepdims=True)
        if pad_lanes:
            # Padded lanes hold exactly 0 entering every layer (their gain and
            # bias are zero-padded, so each layer writes exact 0 there).  The
            # row sum is therefore already exact; the squared sum over-counts
            # each padded lane by exactly mean^2.  Subtract it analytically —
            # a per-row scalar instead of a full-tile select per layer.
            sq = sq - pad_lanes * (mean * mean)
        var = sq * inv_nm1
        std = jnp.sqrt(var)
        # Per-row reciprocal on the EUP; exact (approx error would compound
        # over the N+1 chained LayerNorms and break the 1e-5 tolerance).
        inv = pl.reciprocal(std + EPS, approx=False)
        return g * (centered * inv) + b

    if n_chain <= _UNROLL_MAX_LAYERS:
        # Small L -> static unroll; adjacent layers can interleave.
        for i in range(n_chain):
            x = one_layer(x, gain_ref[i, :], bias_ref[i, :])
    else:
        # Deep stacks: bounded code size / vreg pressure; params are already
        # VMEM-resident so dynamic row indexing is essentially free.
        def body(i, xc):
            return one_layer(xc, gain_ref[i, :], bias_ref[i, :])

        x = lax.fori_loop(0, n_chain, body, x, unroll=2)

    o_ref[...] = x.astype(o_ref.dtype)


def _round_down_to(v, m):
    return (v // m) * m


def _tpu_generation_info():
    """(vmem_capacity_bytes, tensorcores_per_chip) with safe fallbacks."""
    vmem_cap = 128 << 20
    try:
        info = pltpu.get_tpu_info()
        vmem_cap = int(getattr(info, "vmem_capacity_bytes", vmem_cap))
    except Exception:
        pass
    # 64-MiB-per-core parts (v7x-class) ship two TensorCores per chip.
    num_cores = 2 if vmem_cap <= (64 << 20) else 1
    return vmem_cap, num_cores


def _pick_tile_rows(R, Dp, itemsize, sublane, vmem_cap, num_cores):
    """Largest row tile that (a) fits the generation-aware VMEM working-set
    budget and (b) leaves enough grid steps for pipelining (and, on 2-TC
    parts, for feeding both cores)."""
    # Double-buffered input + output block at x.dtype, plus ~4 tile-sized f32
    # temporaries inside the (unrolled) kernel body.
    per_row_bytes = Dp * (4 * itemsize + 4 * 4)
    budget = (12 << 20) if vmem_cap <= (64 << 20) else (20 << 20)
    budget_rows = max(sublane, _round_down_to(budget // per_row_bytes, sublane))

    # >= ~4 steps per core: intra-core double-buffer overlap; 8 total on 2-TC
    # parts so each core still pipelines.  No extra halving on single-TC parts.
    min_steps = 8 if num_cores > 1 else 4
    per_step_rows = max(sublane, _round_down_to(pl.cdiv(R, min_steps), sublane))

    return max(sublane, min(4096, budget_rows, per_step_rows))


def encoder_forward(x, layer_gains, layer_biases, norm_gain, norm_bias,
                    *, tile_rows=None):
    """x: (B, S, D); layer_gains/biases: (N, D); norm_gain/bias: (D,)."""
    B, S, D = x.shape
    if D < 2:
        raise ValueError("LayerNorm with unbiased std requires feature dim >= 2")
    R = B * S

    gains = jnp.concatenate([layer_gains, norm_gain[None, :]], axis=0)    # (L, D)
    biases = jnp.concatenate([layer_biases, norm_bias[None, :]], axis=0)  # (L, D)
    L = gains.shape[0]

    # Lane-dense layout: pad the lane dim ONLY if D is not already a multiple
    # of 128 (the common transformer case needs no pad and no crop at all).
    Dp = pl.cdiv(D, 128) * 128

    x_flat = x.reshape(R, D)
    if Dp != D:
        x_flat = jnp.pad(x_flat, ((0, 0), (0, Dp - D)))
        gains = jnp.pad(gains, ((0, 0), (0, Dp - D)))
        biases = jnp.pad(biases, ((0, 0), (0, Dp - D)))
    # NOTE: no row padding — the grid below is pl.cdiv over the unpadded row
    # count; the ragged last block is handled by Pallas (rows are independent,
    # so OOB rows never influence in-bounds results, and their stores are
    # masked).

    itemsize = jnp.dtype(x.dtype).itemsize
    sublane = max(8, 32 // itemsize)  # 8 for f32, 16 for bf16, 32 for int8/fp8
    vmem_cap, num_cores = _tpu_generation_info()

    if tile_rows is None:
        tile_rows = _pick_tile_rows(R, Dp, itemsize, sublane, vmem_cap, num_cores)
    tile_rows = max(sublane, _round_down_to(tile_rows, sublane))

    num_tiles = pl.cdiv(R, tile_rows)

    vmem_limit = (40 << 20) if vmem_cap <= (64 << 20) else (64 << 20)

    kernel = functools.partial(_encoder_kernel, d_true=D, d_pad=Dp, n_chain=L)

    out_flat = pl.pallas_call(
        kernel,
        out_shape=jax.ShapeDtypeStruct((R, Dp), x.dtype),
        grid_spec=pltpu.PrefetchScalarGridSpec(
            num_scalar_prefetch=0,
            grid=(num_tiles,),
            in_specs=[
                pl.BlockSpec((tile_rows, Dp), lambda i: (i, 0)),
                # Params: full (L, Dp) slab, constant index_map -> DMA'd once.
                pl.BlockSpec((L, Dp), lambda i: (0, 0)),
                pl.BlockSpec((L, Dp), lambda i: (0, 0)),
            ],
            out_specs=pl.BlockSpec((tile_rows, Dp), lambda i: (i, 0)),
        ),
        compiler_params=pltpu.CompilerParams(
            dimension_semantics=("parallel",),
            vmem_limit_bytes=vmem_limit,
        ),
    )(x_flat, gains, biases)

    out = out_flat if Dp == D else out_flat[:, :D]
    return out.reshape(B, S, D)


def _reference(x, layer_gains, layer_biases, norm_gain, norm_bias):
    """Pure-JAX reference of the PyTorch forward (for verification)."""
    def ln(x, g, b):
        mean = jnp.mean(x, axis=-1, keepdims=True)
        std = jnp.std(x, axis=-1, keepdims=True, ddof=1)  # torch.std is unbiased
        return g * (x - mean) / (std + EPS) + b

    for i in range(layer_gains.shape[0]):
        x = ln(x, layer_gains[i], layer_biases[i])
    return ln(x, norm_gain, norm_bias)


if __name__ == "__main__":
    # Small shapes consistent with the module: [batch, seq, embedding]
    B, S, D = 2, 8, 32
    N_LAYERS = 3

    key = jax.random.PRNGKey(0)
    kx, kg, kb, kng, knb = jax.random.split(key, 5)

    x = jax.random.normal(kx, (B, S, D), dtype=jnp.float32)

    # clones() deep-copies one layer N times => identical params across layers.
    one_gain = 1.0 + 0.1 * jax.random.normal(kg, (D,), dtype=jnp.float32)
    one_bias = 0.1 * jax.random.normal(kb, (D,), dtype=jnp.float32)
    layer_gains = jnp.broadcast_to(one_gain, (N_LAYERS, D))
    layer_biases = jnp.broadcast_to(one_bias, (N_LAYERS, D))

    norm_gain = 1.0 + 0.1 * jax.random.normal(kng, (D,), dtype=jnp.float32)
    norm_bias = 0.1 * jax.random.normal(knb, (D,), dtype=jnp.float32)

    out = encoder_forward(x, layer_gains, layer_biases, norm_gain, norm_bias)
    out = jax.block_until_ready(out)

    ref = _reference(x, layer_gains, layer_biases, norm_gain, norm_bias)
    assert out.shape == (B, S, D)
    assert jnp.allclose(out, ref, atol=1e-5, rtol=1e-5), "mismatch vs reference"

    print("KERNEL_OK")
</pallas_src>

<mosaic_0001>
module attributes {stable_mosaic.version = 11 : i64} {
  func.func @_encoder_kernel(%arg0: i32, %arg1: memref<8x128xf32, #tpu.memory_space<vmem>>, %arg2: memref<4x128xf32, #tpu.memory_space<vmem>>, %arg3: memref<4x128xf32, #tpu.memory_space<vmem>>, %arg4: memref<8x128xf32, #tpu.memory_space<vmem>>) attributes {dimension_semantics = [#tpu.dimension_semantics<parallel>], iteration_bounds = array<i64: 2>, scalar_prefetch = 0 : i64, scratch_operands = 0 : i64, tpu.core_type = #tpu.core_type<tc>, window_params = [{transform_indices = @transform_0, window_bounds = array<i64: 8, 128>}, {pipeline_mode = #tpu.pipeline_mode<synchronous>, transform_indices = @transform_1, window_bounds = array<i64: 4, 128>}, {pipeline_mode = #tpu.pipeline_mode<synchronous>, transform_indices = @transform_2, window_bounds = array<i64: 4, 128>}, {transform_indices = @transform_3, window_bounds = array<i64: 8, 128>}]} {
    %c0 = arith.constant 0 : index
    %c0_0 = arith.constant 0 : index
    %0 = vector.load %arg1[%c0, %c0_0] : memref<8x128xf32, #tpu.memory_space<vmem>>, vector<8x128xf32>
    %c0_1 = arith.constant 0 : index
    %c0_2 = arith.constant 0 : index
    %1 = vector.load %arg2[%c0_1, %c0_2] : memref<4x128xf32, #tpu.memory_space<vmem>>, vector<1x128xf32>
    %2 = vector.shape_cast %1 : vector<1x128xf32> to vector<128xf32>
    %c0_3 = arith.constant 0 : index
    %c0_4 = arith.constant 0 : index
    %3 = vector.load %arg3[%c0_3, %c0_4] : memref<4x128xf32, #tpu.memory_space<vmem>>, vector<1x128xf32>
    %4 = vector.shape_cast %3 : vector<1x128xf32> to vector<128xf32>
    %cst = arith.constant dense<0.000000e+00> : vector<8xf32>
    %5 = vector.multi_reduction <add>, %0, %cst [1] : vector<8x128xf32> to vector<8xf32>
    %6 = vector.shape_cast %5 : vector<8xf32> to vector<8x1xf32>
    %cst_5 = arith.constant 3.125000e-02 : f32
    %7 = vector.broadcast %cst_5 : f32 to vector<8x1xf32>
    %8 = arith.mulf %6, %7 : vector<8x1xf32>
    %9 = vector.broadcast %8 : vector<8x1xf32> to vector<8x128xf32>
    %10 = arith.subf %0, %9 : vector<8x128xf32>
    %11 = arith.mulf %10, %10 : vector<8x128xf32>
    %cst_6 = arith.constant dense<0.000000e+00> : vector<8xf32>
    %12 = vector.multi_reduction <add>, %11, %cst_6 [1] : vector<8x128xf32> to vector<8xf32>
    %13 = vector.shape_cast %12 : vector<8xf32> to vector<8x1xf32>
    %14 = arith.mulf %8, %8 : vector<8x1xf32>
    %cst_7 = arith.constant 9.600000e+01 : f32
    %15 = vector.broadcast %cst_7 : f32 to vector<8x1xf32>
    %16 = arith.mulf %15, %14 : vector<8x1xf32>
    %17 = arith.subf %13, %16 : vector<8x1xf32>
    %cst_8 = arith.constant 0.0322580636 : f32
    %18 = vector.broadcast %cst_8 : f32 to vector<8x1xf32>
    %19 = arith.mulf %17, %18 : vector<8x1xf32>
    %20 = math.sqrt %19 : vector<8x1xf32>
    %cst_9 = arith.constant 9.99999997E-7 : f32
    %21 = vector.broadcast %cst_9 : f32 to vector<8x1xf32>
    %22 = arith.addf %20, %21 : vector<8x1xf32>
    %23 = tpu.reciprocal %22 : vector<8x1xf32> -> vector<8x1xf32>
    %24 = vector.broadcast %23 : vector<8x1xf32> to vector<8x128xf32>
    %25 = arith.mulf %10, %24 : vector<8x128xf32>
    %26 = vector.shape_cast %2 : vector<128xf32> to vector<1x128xf32>
    %27 = vector.broadcast %26 : vector<1x128xf32> to vector<8x128xf32>
    %28 = arith.mulf %27, %25 : vector<8x128xf32>
    %29 = vector.shape_cast %4 : vector<128xf32> to vector<1x128xf32>
    %30 = vector.broadcast %29 : vector<1x128xf32> to vector<8x128xf32>
    %31 = arith.addf %28, %30 : vector<8x128xf32>
    %c1 = arith.constant 1 : index
    %c0_10 = arith.constant 0 : index
    %32 = vector.load %arg2[%c1, %c0_10] : memref<4x128xf32, #tpu.memory_space<vmem>>, vector<1x128xf32>
    %33 = vector.shape_cast %32 : vector<1x128xf32> to vector<128xf32>
    %c1_11 = arith.constant 1 : index
    %c0_12 = arith.constant 0 : index
    %34 = vector.load %arg3[%c1_11, %c0_12] : memref<4x128xf32, #tpu.memory_space<vmem>>, vector<1x128xf32>
    %35 = vector.shape_cast %34 : vector<1x128xf32> to vector<128xf32>
    %cst_13 = arith.constant dense<0.000000e+00> : vector<8xf32>
    %36 = vector.multi_reduction <add>, %31, %cst_13 [1] : vector<8x128xf32> to vector<8xf32>
    %37 = vector.shape_cast %36 : vector<8xf32> to vector<8x1xf32>
    %cst_14 = arith.constant 3.125000e-02 : f32
    %38 = vector.broadcast %cst_14 : f32 to vector<8x1xf32>
    %39 = arith.mulf %37, %38 : vector<8x1xf32>
    %40 = vector.broadcast %39 : vector<8x1xf32> to vector<8x128xf32>
    %41 = arith.subf %31, %40 : vector<8x128xf32>
    %42 = arith.mulf %41, %41 : vector<8x128xf32>
    %cst_15 = arith.constant dense<0.000000e+00> : vector<8xf32>
    %43 = vector.multi_reduction <add>, %42, %cst_15 [1] : vector<8x128xf32> to vector<8xf32>
    %44 = vector.shape_cast %43 : vector<8xf32> to vector<8x1xf32>
    %45 = arith.mulf %39, %39 : vector<8x1xf32>
    %cst_16 = arith.constant 9.600000e+01 : f32
    %46 = vector.broadcast %cst_16 : f32 to vector<8x1xf32>
    %47 = arith.mulf %46, %45 : vector<8x1xf32>
    %48 = arith.subf %44, %47 : vector<8x1xf32>
    %cst_17 = arith.constant 0.0322580636 : f32
    %49 = vector.broadcast %cst_17 : f32 to vector<8x1xf32>
    %50 = arith.mulf %48, %49 : vector<8x1xf32>
    %51 = math.sqrt %50 : vector<8x1xf32>
    %cst_18 = arith.constant 9.99999997E-7 : f32
    %52 = vector.broadcast %cst_18 : f32 to vector<8x1xf32>
    %53 = arith.addf %51, %52 : vector<8x1xf32>
    %54 = tpu.reciprocal %53 : vector<8x1xf32> -> vector<8x1xf32>
    %55 = vector.broadcast %54 : vector<8x1xf32> to vector<8x128xf32>
    %56 = arith.mulf %41, %55 : vector<8x128xf32>
    %57 = vector.shape_cast %33 : vector<128xf32> to vector<1x128xf32>
    %58 = vector.broadcast %57 : vector<1x128xf32> to vector<8x128xf32>
    %59 = arith.mulf %58, %56 : vector<8x128xf32>
    %60 = vector.shape_cast %35 : vector<128xf32> to vector<1x128xf32>
    %61 = vector.broadcast %60 : vector<1x128xf32> to vector<8x128xf32>
    %62 = arith.addf %59, %61 : vector<8x128xf32>
    %c2 = arith.constant 2 : index
    %c0_19 = arith.constant 0 : index
    %63 = vector.load %arg2[%c2, %c0_19] : memref<4x128xf32, #tpu.memory_space<vmem>>, vector<1x128xf32>
    %64 = vector.shape_cast %63 : vector<1x128xf32> to vector<128xf32>
    %c2_20 = arith.constant 2 : index
    %c0_21 = arith.constant 0 : index
    %65 = vector.load %arg3[%c2_20, %c0_21] : memref<4x128xf32, #tpu.memory_space<vmem>>, vector<1x128xf32>
    %66 = vector.shape_cast %65 : vector<1x128xf32> to vector<128xf32>
    %cst_22 = arith.constant dense<0.000000e+00> : vector<8xf32>
    %67 = vector.multi_reduction <add>, %62, %cst_22 [1] : vector<8x128xf32> to vector<8xf32>
    %68 = vector.shape_cast %67 : vector<8xf32> to vector<8x1xf32>
    %cst_23 = arith.constant 3.125000e-02 : f32
    %69 = vector.broadcast %cst_23 : f32 to vector<8x1xf32>
    %70 = arith.mulf %68, %69 : vector<8x1xf32>
    %71 = vector.broadcast %70 : vector<8x1xf32> to vector<8x128xf32>
    %72 = arith.subf %62, %71 : vector<8x128xf32>
    %73 = arith.mulf %72, %72 : vector<8x128xf32>
    %cst_24 = arith.constant dense<0.000000e+00> : vector<8xf32>
    %74 = vector.multi_reduction <add>, %73, %cst_24 [1] : vector<8x128xf32> to vector<8xf32>
    %75 = vector.shape_cast %74 : vector<8xf32> to vector<8x1xf32>
    %76 = arith.mulf %70, %70 : vector<8x1xf32>
    %cst_25 = arith.constant 9.600000e+01 : f32
    %77 = vector.broadcast %cst_25 : f32 to vector<8x1xf32>
    %78 = arith.mulf %77, %76 : vector<8x1xf32>
    %79 = arith.subf %75, %78 : vector<8x1xf32>
    %cst_26 = arith.constant 0.0322580636 : f32
    %80 = vector.broadcast %cst_26 : f32 to vector<8x1xf32>
    %81 = arith.mulf %79, %80 : vector<8x1xf32>
    %82 = math.sqrt %81 : vector<8x1xf32>
    %cst_27 = arith.constant 9.99999997E-7 : f32
    %83 = vector.broadcast %cst_27 : f32 to vector<8x1xf32>
    %84 = arith.addf %82, %83 : vector<8x1xf32>
    %85 = tpu.reciprocal %84 : vector<8x1xf32> -> vector<8x1xf32>
    %86 = vector.broadcast %85 : vector<8x1xf32> to vector<8x128xf32>
    %87 = arith.mulf %72, %86 : vector<8x128xf32>
    %88 = vector.shape_cast %64 : vector<128xf32> to vector<1x128xf32>
    %89 = vector.broadcast %88 : vector<1x128xf32> to vector<8x128xf32>
    %90 = arith.mulf %89, %87 : vector<8x128xf32>
    %91 = vector.shape_cast %66 : vector<128xf32> to vector<1x128xf32>
    %92 = vector.broadcast %91 : vector<1x128xf32> to vector<8x128xf32>
    %93 = arith.addf %90, %92 : vector<8x128xf32>
    %c3 = arith.constant 3 : index
    %c0_28 = arith.constant 0 : index
    %94 = vector.load %arg2[%c3, %c0_28] : memref<4x128xf32, #tpu.memory_space<vmem>>, vector<1x128xf32>
    %95 = vector.shape_cast %94 : vector<1x128xf32> to vector<128xf32>
    %c3_29 = arith.constant 3 : index
    %c0_30 = arith.constant 0 : index
    %96 = vector.load %arg3[%c3_29, %c0_30] : memref<4x128xf32, #tpu.memory_space<vmem>>, vector<1x128xf32>
    %97 = vector.shape_cast %96 : vector<1x128xf32> to vector<128xf32>
    %cst_31 = arith.constant dense<0.000000e+00> : vector<8xf32>
    %98 = vector.multi_reduction <add>, %93, %cst_31 [1] : vector<8x128xf32> to vector<8xf32>
    %99 = vector.shape_cast %98 : vector<8xf32> to vector<8x1xf32>
    %cst_32 = arith.constant 3.125000e-02 : f32
    %100 = vector.broadcast %cst_32 : f32 to vector<8x1xf32>
    %101 = arith.mulf %99, %100 : vector<8x1xf32>
    %102 = vector.broadcast %101 : vector<8x1xf32> to vector<8x128xf32>
    %103 = arith.subf %93, %102 : vector<8x128xf32>
    %104 = arith.mulf %103, %103 : vector<8x128xf32>
    %cst_33 = arith.constant dense<0.000000e+00> : vector<8xf32>
    %105 = vector.multi_reduction <add>, %104, %cst_33 [1] : vector<8x128xf32> to vector<8xf32>
    %106 = vector.shape_cast %105 : vector<8xf32> to vector<8x1xf32>
    %107 = arith.mulf %101, %101 : vector<8x1xf32>
    %cst_34 = arith.constant 9.600000e+01 : f32
    %108 = vector.broadcast %cst_34 : f32 to vector<8x1xf32>
    %109 = arith.mulf %108, %107 : vector<8x1xf32>
    %110 = arith.subf %106, %109 : vector<8x1xf32>
    %cst_35 = arith.constant 0.0322580636 : f32
    %111 = vector.broadcast %cst_35 : f32 to vector<8x1xf32>
    %112 = arith.mulf %110, %111 : vector<8x1xf32>
    %113 = math.sqrt %112 : vector<8x1xf32>
    %cst_36 = arith.constant 9.99999997E-7 : f32
    %114 = vector.broadcast %cst_36 : f32 to vector<8x1xf32>
    %115 = arith.addf %113, %114 : vector<8x1xf32>
    %116 = tpu.reciprocal %115 : vector<8x1xf32> -> vector<8x1xf32>
    %117 = vector.broadcast %116 : vector<8x1xf32> to vector<8x128xf32>
    %118 = arith.mulf %103, %117 : vector<8x128xf32>
    %119 = vector.shape_cast %95 : vector<128xf32> to vector<1x128xf32>
    %120 = vector.broadcast %119 : vector<1x128xf32> to vector<8x128xf32>
    %121 = arith.mulf %120, %118 : vector<8x128xf32>
    %122 = vector.shape_cast %97 : vector<128xf32> to vector<1x128xf32>
    %123 = vector.broadcast %122 : vector<1x128xf32> to vector<8x128xf32>
    %124 = arith.addf %121, %123 : vector<8x128xf32>
    %c0_37 = arith.constant 0 : index
    %c0_38 = arith.constant 0 : index
    %125 = vector.load %arg4[%c0_37, %c0_38] : memref<8x128xf32, #tpu.memory_space<vmem>>, vector<8x128xf32>
    tpu.vector_store %arg4[%c0_37, %c0_38], %124 {strides = array<i32>} : memref<8x128xf32, #tpu.memory_space<vmem>>, vector<8x128xf32>,
    return
  }
  func.func @transform_0(%arg0: i32) -> (i32, i32) {
    %c0_i32 = arith.constant 0 : i32
    %c0_i32_0 = arith.constant 0 : i32
    return %arg0, %c0_i32 : i32, i32
  }
  func.func @transform_1(%arg0: i32) -> (i32, i32) {
    %c0_i32 = arith.constant 0 : i32
    %c0_i32_0 = arith.constant 0 : i32
    %c0_i32_1 = arith.constant 0 : i32
    return %c0_i32, %c0_i32_0 : i32, i32
  }
  func.func @transform_2(%arg0: i32) -> (i32, i32) {
    %c0_i32 = arith.constant 0 : i32
    %c0_i32_0 = arith.constant 0 : i32
    %c0_i32_1 = arith.constant 0 : i32
    return %c0_i32, %c0_i32_0 : i32, i32
  }
  func.func @transform_3(%arg0: i32) -> (i32, i32) {
    %c0_i32 = arith.constant 0 : i32
    %c0_i32_0 = arith.constant 0 : i32
    return %arg0, %c0_i32 : i32, i32
  }
}

</mosaic_0001>

<llo_original>
// kernel: tpu_custom_call.1
$region0: #{tpu_custom_call.1}
  #allocation0 [shape = 'u32[]', space=smem, size = 0x4, offset = 0x4, fixed_abs, tag = 'smem constant byte address 0x4 - core index']
  #allocation1 [shape = 'u32[72,128]{1,0:T(1,128)}', space=vmem, size = 0x9000, scoped, tag = 'internal scratch']
  %s0 = inlined_call_operand.hbm [shape: f32[16,128], index: 0, kind: input, shape index: {}]
  %s1 = inlined_call_operand.hbm [shape: f32[4,128], index: 1, kind: input, shape index: {}]
  %s2 = inlined_call_operand.hbm [shape: f32[4,128], index: 2, kind: input, shape index: {}]
  %s3 = inlined_call_operand.hbm [shape: f32[16,128], index: 3, kind: output, shape index: {}]
  %s4 = sld [smem:[#allocation0]]
  $region57: #{tpu_custom_call.1} parent=0
    _
  %s6 = ssub.s32 1, %s4
  %s7 = scalar_select 0, %s6, %s4
  $region1: #{tpu_custom_call.1} parent=0
    #allocation2 [shape = 'u8[8192]{0}', space=vmem, size = 0x2000, scoped, tag = 'input window, operand 0']
    #allocation3 [shape = 's32[2]{0}', space=sflag, size = 0x8, scoped, tag = 'scoped memory for tpu_custom_call.1']
    #allocation4 [shape = 's32[2]{0}', space=sflag, size = 0x8, scoped, tag = 'scoped memory for tpu_custom_call.1']
    #allocation5 [shape = 'u8[2048]{0}', space=vmem, size = 0x800, scoped, tag = 'input window, operand 1, single buffered']
    #allocation6 [shape = 's32[1]{0}', space=sflag, size = 0x4, scoped, tag = 'scoped memory for tpu_custom_call.1']
    #allocation7 [shape = 'u8[2048]{0}', space=vmem, size = 0x800, scoped, tag = 'input window, operand 2, single buffered']
    #allocation8 [shape = 'u8[8192]{0}', space=vmem, size = 0x2000, scoped, tag = 'output window, operand 0']
    %8 = vsyncpa [#allocation3], 0
    %s9 = scalar_lea.sflag [#allocation3], 1
    %10 = vsyncpa %s9, 0
    %11 = vsyncpa [#allocation6], 0
    %12 = vsyncpa [#allocation4], 0
    %s13 = scalar_lea.sflag [#allocation4], 1
    %14 = vsyncpa %s13, 0
    loop: start=0, step=1, limit=4
    $region2: #{tpu_custom_call.1} parent=1 // loop_pre_header
      _
    $region3: #{tpu_custom_call.1} parent=1 // loop_header
      %s16 = sphi 0, %s20
      %p17 = scmp.ge.s32.totalorder %s16, 4
      %s26 = sphi 0, %s28
      %s29 = sphi 0, %s26
      %s30 = sphi 0, %s29
      %s46 = sphi 0, %s30
      %s50 = sphi 0, %s50
      %s52 = sphi 0, %s50
      %s53 = sphi 0, %s52
      %s67 = sphi 0, %s53
      %s71 = sphi 0, %s71
      %s73 = sphi 0, %s71
      %s74 = sphi 0, %s73
      %s88 = sphi 0, %s74
      %s94 = sphi 0, %s96
      %s97 = sphi 0, %s94
      %s98 = sphi 0, %s97
      %s114 = sphi 0, %s98
    $region4: #{tpu_custom_call.1} parent=1 // loop_header_branch
      %19 = sbr.rel (%p17) target = $region8
    $region5: #{tpu_custom_call.1} parent=1 // loop_body
      %s21 = ssub.s32 %s16, 1
      %s22 = ssub.s32 %s16, 2
      %s23 = sadd.s32 %s16, 1
      %s24 = ssub.s32 %s16, %s23
      %p25 = scmp.eq.s32.totalorder %s24, 0
      %s27 = sadd.s32 %s26, 1
      %s28 = scalar_select %p25, %s26, %s27
      %p31 = pneg %p25
      %p32 = scmp.eq.s32.totalorder %s16, 1
      %p33 = por %p31, %p32
      %p34 = scmp.ne.s32.totalorder %s26, %s29
      %p35 = scmp.eq.s32.totalorder %s16, 0
      %p36 = por %p34, %p35
      %p37 = scmp.ne.s32.totalorder %s26, %s29
      %p38 = scmp.eq.s32.totalorder %s21, 1
      %p39 = por %p37, %p38
      %p40 = scmp.ne.s32.totalorder %s29, %s30
      %p41 = scmp.eq.s32.totalorder %s21, 0
      %p42 = por %p40, %p41
      %p43 = scmp.ne.s32.totalorder %s29, %s30
      %p44 = scmp.eq.s32.totalorder %s22, 1
      %p45 = por %p43, %p44
      %p47 = scmp.ne.s32.totalorder %s30, %s46
      %p48 = scmp.eq.s32.totalorder %s22, 0
      %p49 = por %p47, %p48
      %s51 = sadd.s32 %s50, 1
      %p54 = scmp.eq.s32.totalorder %s16, 1
      %p55 = scmp.ne.s32.totalorder %s50, %s52
      %p56 = scmp.eq.s32.totalorder %s16, 0
      %p57 = por %p55, %p56
      %p58 = scmp.ne.s32.totalorder %s50, %s52
      %p59 = scmp.eq.s32.totalorder %s21, 1
      %p60 = por %p58, %p59
      %p61 = scmp.ne.s32.totalorder %s52, %s53
      %p62 = scmp.eq.s32.totalorder %s21, 0
      %p63 = por %p61, %p62
      %p64 = scmp.ne.s32.totalorder %s52, %s53
      %p65 = scmp.eq.s32.totalorder %s22, 1
      %p66 = por %p64, %p65
      %p68 = scmp.ne.s32.totalorder %s53, %s67
      %p69 = scmp.eq.s32.totalorder %s22, 0
      %p70 = por %p68, %p69
      %s72 = sadd.s32 %s71, 1
      %p75 = scmp.eq.s32.totalorder %s16, 1
      %p76 = scmp.ne.s32.totalorder %s71, %s73
      %p77 = scmp.eq.s32.totalorder %s16, 0
      %p78 = por %p76, %p77
      %p79 = scmp.ne.s32.totalorder %s71, %s73
      %p80 = scmp.eq.s32.totalorder %s21, 1
      %p81 = por %p79, %p80
      %p82 = scmp.ne.s32.totalorder %s73, %s74
      %p83 = scmp.eq.s32.totalorder %s21, 0
      %p84 = por %p82, %p83
      %p85 = scmp.ne.s32.totalorder %s73, %s74
      %p86 = scmp.eq.s32.totalorder %s22, 1
      %p87 = por %p85, %p86
      %p89 = scmp.ne.s32.totalorder %s74, %s88
      %p90 = scmp.eq.s32.totalorder %s22, 0
      %p91 = por %p89, %p90
      %s92 = ssub.s32 %s16, %s23
      %p93 = scmp.eq.s32.totalorder %s92, 0
      %s95 = sadd.s32 %s94, 1
      %s96 = scalar_select %p93, %s94, %s95
      %p99 = pneg %p93
      %p100 = scmp.eq.s32.totalorder %s16, 1
      %p101 = por %p99, %p100
      %p102 = scmp.ne.s32.totalorder %s94, %s97
      %p103 = scmp.eq.s32.totalorder %s16, 0
      %p104 = por %p102, %p103
      %p105 = scmp.ne.s32.totalorder %s94, %s97
      %p106 = scmp.eq.s32.totalorder %s21, 1
      %p107 = por %p105, %p106
      %p108 = scmp.ne.s32.totalorder %s97, %s98
      %p109 = scmp.eq.s32.totalorder %s21, 0
      %p110 = por %p108, %p109
      %p111 = scmp.ne.s32.totalorder %s97, %s98
      %p112 = scmp.eq.s32.totalorder %s22, 1
      %p113 = por %p111, %p112
      %p115 = scmp.ne.s32.totalorder %s98, %s114
      %p116 = scmp.eq.s32.totalorder %s22, 0
      %p117 = por %p115, %p116
      %p118 = scmp.le.s32.totalorder 1, %s16
      %p119 = scmp.lt.s32.totalorder %s16, 3
      %p120 = pnand %p118, %p119
      %p121 = pneg %p120
      // Predicated region
      $region9: #{tpu_custom_call.1} parent=5 // pred_check
        _
      $region10: #{tpu_custom_call.1} parent=5 // pred_check_branch
        %123 = sbr.rel (%p120) target = $region12
      $region11: #{tpu_custom_call.1} parent=5 // pred_region
        %s124 = ssub.s32 %s16, 1
        // Predicated region
        $region13: #{tpu_custom_call.1} parent=11 // pred_check
          %p125 = pneg %p63
        $region14: #{tpu_custom_call.1} parent=11 // pred_check_branch
          %127 = sbr.rel (%p125) target = $region16
        $region15: #{tpu_custom_call.1} parent=11 // pred_region
          %129 = vsyncadd [#allocation6], 0
          %s131 = sshll.u32 %s1, 4
          %s132 = int_to_ptr.hbm [resolvable:$true] %s131
          %s133 = sshll.u32 [#allocation5], 4
          %s134 = int_to_ptr.vmem [resolvable:$true] %s133
          %136 = dma.hbm_to_vmem [thread:$0]  %s132, 64, %s134, [#allocation6]
        $region16: #{tpu_custom_call.1} parent=11 // pred_fallthru
          _
        // Predicated region
        $region17: #{tpu_custom_call.1} parent=11 // pred_check
          %p137 = pneg %p84
        $region18: #{tpu_custom_call.1} parent=11 // pred_check_branch
          %139 = sbr.rel (%p137) target = $region20
        $region19: #{tpu_custom_call.1} parent=11 // pred_region
          %141 = vsyncadd [#allocation6], 0
          %s143 = sshll.u32 %s2, 4
          %s144 = int_to_ptr.hbm [resolvable:$true] %s143
          %s145 = sshll.u32 [#allocation7], 4
          %s146 = int_to_ptr.vmem [resolvable:$true] %s145
          %148 = dma.hbm_to_vmem [thread:$0]  %s144, 64, %s146, [#allocation6]
        $region20: #{tpu_custom_call.1} parent=11 // pred_fallthru
          _
      $region12: #{tpu_custom_call.1} parent=5 // pred_fallthru
        _
      %p149 = scmp.lt.s32.totalorder %s16, 2
      // Predicated region
      $region21: #{tpu_custom_call.1} parent=5 // pred_check
        %p150 = pneg %p149
      $region22: #{tpu_custom_call.1} parent=5 // pred_check_branch
        %152 = sbr.rel (%p150) target = $region24
      $region23: #{tpu_custom_call.1} parent=5 // pred_region
        // Predicated region
        $region25: #{tpu_custom_call.1} parent=23 // pred_check
          %p153 = pneg %p36
        $region26: #{tpu_custom_call.1} parent=23 // pred_check_branch
          %155 = sbr.rel (%p153) target = $region28
        $region27: #{tpu_custom_call.1} parent=23 // pred_region
          %s156 = sand.u32 %s26, 1
          %s157 = scalar_lea.sflag [#allocation3], %s156
          %s158 = sand.u32 %s26, 1
          %s159 = smul.addr %s158, 8
          %s160 = scalar_lea.vmem [#allocation2], %s159
          %162 = vsyncadd %s157, 0
          %s163 = smul.addr %s16, 8
          %s164 = scalar_lea.hbm %s0, %s163
          %s166 = sshll.u32 %s164, 4
          %s167 = int_to_ptr.hbm [resolvable:$true] %s166
          %s168 = sshll.u32 %s160, 4
          %s169 = int_to_ptr.vmem [resolvable:$true] %s168
          %171 = dma.hbm_to_vmem [thread:$0]  %s167, 128, %s169, %s157
        $region28: #{tpu_custom_call.1} parent=23 // pred_fallthru
          _
      $region24: #{tpu_custom_call.1} parent=5 // pred_fallthru
        _
      %p172 = scmp.le.s32.totalorder 1, %s16
      %p173 = scmp.lt.s32.totalorder %s16, 3
      %p174 = pnand %p172, %p173
      %p175 = pneg %p174
      // Predicated region
      $region29: #{tpu_custom_call.1} parent=5 // pred_check
        _
      $region30: #{tpu_custom_call.1} parent=5 // pred_check_branch
        %177 = sbr.rel (%p174) target = $region32
      $region31: #{tpu_custom_call.1} parent=5 // pred_region
        %s178 = ssub.s32 %s16, 1
        %s179 = sand.u32 %s29, 1
        %s180 = scalar_lea.sflag [#allocation3], %s179
        %s181 = sand.u32 %s29, 1
        %s182 = smul.addr %s181, 8
        %s183 = scalar_lea.vmem [#allocation2], %s182
        // Predicated region
        $region33: #{tpu_custom_call.1} parent=31 // pred_check
          %p184 = pneg %p42
        $region34: #{tpu_custom_call.1} parent=31 // pred_check_branch
          %186 = sbr.rel (%p184) target = $region36
        $region35: #{tpu_custom_call.1} parent=31 // pred_region
          %188 = dma.done %s180, 128
        $region36: #{tpu_custom_call.1} parent=31 // pred_fallthru
          _
        // Predicated region
        $region37: #{tpu_custom_call.1} parent=31 // pred_check
          %p189 = pneg %p63
        $region38: #{tpu_custom_call.1} parent=31 // pred_check_branch
          %191 = sbr.rel (%p189) target = $region40
        $region39: #{tpu_custom_call.1} parent=31 // pred_region
          %193 = dma.done [#allocation6], 64
        $region40: #{tpu_custom_call.1} parent=31 // pred_fallthru
          _
        // Predicated region
        $region41: #{tpu_custom_call.1} parent=31 // pred_check
          %p194 = pneg %p84
        $region42: #{tpu_custom_call.1} parent=31 // pred_check_branch
          %196 = sbr.rel (%p194) target = $region44
        $region43: #{tpu_custom_call.1} parent=31 // pred_region
          %198 = dma.done [#allocation6], 64
        $region44: #{tpu_custom_call.1} parent=31 // pred_fallthru
          _
        %s199 = sand.u32 %s29, 1
        %s200 = scalar_lea.sflag [#allocation3], %s199
        %s201 = sand.u32 %s29, 1
        %s202 = smul.addr %s201, 8
        %s203 = scalar_lea.vmem [#allocation2], %s202
        %p204 = pneg %p42
        %p205 = pneg %p39
        %p206 = pneg %p63
        %p207 = pneg %p60
        %p208 = pneg %p84
        %p209 = pneg %p81
        %p210 = pneg %p110
        %p211 = pneg %p107
        %s212 = sand.u32 %s97, 1
        %s213 = scalar_lea.sflag [#allocation4], %s212
        %s214 = sand.u32 %s97, 1
        %s215 = smul.addr %s214, 8
        %s216 = scalar_lea.vmem [#allocation8], %s215
        %v217 = vld [vmem:[%s183] sm:$0xff]
        %v218 = vld [vmem:[#allocation5] sm:$0x1]
        %v219 = vld [vmem:[#allocation7] sm:$0x1]
        %220 = vadd.xlane.f32.xlu0 %v217
        %v221 = vpop.xlane.xlu0 %220
        %v222 = vmul.f32 %v221, 0.03125
        %v223 = vsub.f32 %v217, %v222
        %v224 = vmul.f32 %v223, %v223
        %225 = vadd.xlane.f32.xlu0 %v224
        %v226 = vpop.xlane.xlu0 %225
        %v227 = vmul.f32 %v222, %v222
        %v228 = vmul.f32 %v227, 96.0
        %v229 = vsub.f32 %v226, %v228
        %v230 = vmul.f32 %v229, 0.032258064
        %v231 = vrsqrt.pop %v230
        %v232 = vmul.f32 %v231, %v230
        %v233 = vmul.f32 %v232, %v231
        %v234 = vmul.f32 0.5, %v233
        %v235 = vsub.f32 1.5, %v234
        %v236 = vmul.f32 %v231, %v235
        %v237 = vmul.f32 %v230, %v236
        %vm238 = vcmp.eq.f32.partialorder %v230, inf
        %v239 = vsel %vm238, %v230, %v237
        %vm240 = vcmp.eq.f32.partialorder %v230, 0.0
        %v241 = vand.u32 %v230, 2147483648
        %v242 = vsel %vm240, %v241, %v239
        %v243 = vadd.f32 %v242, 1e-06
        %v244 = vrcp.pop %v243
        %v245 = vmul.f32 %v243, %v244
        %v246 = vsub.f32 1.0, %v245
        %v247 = vmul.f32 %v244, %v246
        %v248 = vadd.f32 %v244, %v247
        %vm249 = vweird.f32 %v243
        %vm250 = vweird.f32 %v244
        %vm251 = vmor %vm249, %vm250
        %v252 = vsel %vm251, %v244, %v248
        %v253 = vand.u32 2147483647, %v243
        %vm254 = vcmp.eq.f32.partialorder %v253, 8.507059e+37
        %v255 = vand.u32 %v243, 2147483648
        %v256 = vor.u32 1.1754944e-38, %v255
        %v257 = vsel %vm254, %v256, %v252
        %v258 = vmul.f32 %v223, %v257
        %v259 = vperm.slane %v218, 0
        %v260 = vmul.f32 %v259, %v258
        %v261 = vperm.slane %v219, 0
        %v262 = vadd.f32 %v260, %v261
        %v263 = vld [vmem:[#allocation5 + $0x1] sm:$0x1]
        %v264 = vld [vmem:[#allocation7 + $0x1] sm:$0x1]
        %265 = vadd.xlane.f32.xlu0 %v262
        %v266 = vpop.xlane.xlu0 %265
        %v267 = vmul.f32 %v266, 0.03125
        %v268 = vsub.f32 %v262, %v267
        %v269 = vmul.f32 %v268, %v268
        %270 = vadd.xlane.f32.xlu0 %v269
        %v271 = vpop.xlane.xlu0 %270
        %v272 = vmul.f32 %v267, %v267
        %v273 = vmul.f32 %v272, 96.0
        %v274 = vsub.f32 %v271, %v273
        %v275 = vmul.f32 %v274, 0.032258064
        %v276 = vrsqrt.pop %v275
        %v277 = vmul.f32 %v276, %v275
        %v278 = vmul.f32 %v277, %v276
        %v279 = vmul.f32 0.5, %v278
        %v280 = vsub.f32 1.5, %v279
        %v281 = vmul.f32 %v276, %v280
        %v282 = vmul.f32 %v275, %v281
        %vm283 = vcmp.eq.f32.partialorder %v275, inf
        %v284 = vsel %vm283, %v275, %v282
        %vm285 = vcmp.eq.f32.partialorder %v275, 0.0
        %v286 = vand.u32 %v275, 2147483648
        %v287 = vsel %vm285, %v286, %v284
        %v288 = vadd.f32 %v287, 1e-06
        %v289 = vrcp.pop %v288
        %v290 = vmul.f32 %v288, %v289
        %v291 = vsub.f32 1.0, %v290
        %v292 = vmul.f32 %v289, %v291
        %v293 = vadd.f32 %v289, %v292
        %vm294 = vweird.f32 %v288
        %vm295 = vweird.f32 %v289
        %vm296 = vmor %vm294, %vm295
        %v297 = vsel %vm296, %v289, %v293
        %v298 = vand.u32 2147483647, %v288
        %vm299 = vcmp.eq.f32.partialorder %v298, 8.507059e+37
        %v300 = vand.u32 %v288, 2147483648
        %v301 = vor.u32 1.1754944e-38, %v300
        %v302 = vsel %vm299, %v301, %v297
        %v303 = vmul.f32 %v268, %v302
        %v304 = vperm.slane %v263, 0
        %v305 = vmul.f32 %v304, %v303
        %v306 = vperm.slane %v264, 0
        %v307 = vadd.f32 %v305, %v306
        %v308 = vld [vmem:[#allocation5 + $0x2] sm:$0x1]
        %v309 = vld [vmem:[#allocation7 + $0x2] sm:$0x1]
        %310 = vadd.xlane.f32.xlu0 %v307
        %v311 = vpop.xlane.xlu0 %310
        %v312 = vmul.f32 %v311, 0.03125
        %v313 = vsub.f32 %v307, %v312
        %v314 = vmul.f32 %v313, %v313
        %315 = vadd.xlane.f32.xlu0 %v314
        %v316 = vpop.xlane.xlu0 %315
        %v317 = vmul.f32 %v312, %v312
        %v318 = vmul.f32 %v317, 96.0
        %v319 = vsub.f32 %v316, %v318
        %v320 = vmul.f32 %v319, 0.032258064
        %v321 = vrsqrt.pop %v320
        %v322 = vmul.f32 %v321, %v320
        %v323 = vmul.f32 %v322, %v321
        %v324 = vmul.f32 0.5, %v323
        %v325 = vsub.f32 1.5, %v324
        %v326 = vmul.f32 %v321, %v325
        %v327 = vmul.f32 %v320, %v326
        %vm328 = vcmp.eq.f32.partialorder %v320, inf
        %v329 = vsel %vm328, %v320, %v327
        %vm330 = vcmp.eq.f32.partialorder %v320, 0.0
        %v331 = vand.u32 %v320, 2147483648
        %v332 = vsel %vm330, %v331, %v329
        %v333 = vadd.f32 %v332, 1e-06
        %v334 = vrcp.pop %v333
        %v335 = vmul.f32 %v333, %v334
        %v336 = vsub.f32 1.0, %v335
        %v337 = vmul.f32 %v334, %v336
        %v338 = vadd.f32 %v334, %v337
        %vm339 = vweird.f32 %v333
        %vm340 = vweird.f32 %v334
        %vm341 = vmor %vm339, %vm340
        %v342 = vsel %vm341, %v334, %v338
        %v343 = vand.u32 2147483647, %v333
        %vm344 = vcmp.eq.f32.partialorder %v343, 8.507059e+37
        %v345 = vand.u32 %v333, 2147483648
        %v346 = vor.u32 1.1754944e-38, %v345
        %v347 = vsel %vm344, %v346, %v342
        %v348 = vmul.f32 %v313, %v347
        %v349 = vperm.slane %v308, 0
        %v350 = vmul.f32 %v349, %v348
        %v351 = vperm.slane %v309, 0
        %v352 = vadd.f32 %v350, %v351
        %v353 = vld [vmem:[#allocation5 + $0x3] sm:$0x1]
        %v354 = vld [vmem:[#allocation7 + $0x3] sm:$0x1]
        %355 = vadd.xlane.f32.xlu0 %v352
        %v356 = vpop.xlane.xlu0 %355
        %v357 = vmul.f32 %v356, 0.03125
        %v358 = vsub.f32 %v352, %v357
        %v359 = vmul.f32 %v358, %v358
        %360 = vadd.xlane.f32.xlu0 %v359
        %v361 = vpop.xlane.xlu0 %360
        %v362 = vmul.f32 %v357, %v357
        %v363 = vmul.f32 %v362, 96.0
        %v364 = vsub.f32 %v361, %v363
        %v365 = vmul.f32 %v364, 0.032258064
        %v366 = vrsqrt.pop %v365
        %v367 = vmul.f32 %v366, %v365
        %v368 = vmul.f32 %v367, %v366
        %v369 = vmul.f32 0.5, %v368
        %v370 = vsub.f32 1.5, %v369
        %v371 = vmul.f32 %v366, %v370
        %v372 = vmul.f32 %v365, %v371
        %vm373 = vcmp.eq.f32.partialorder %v365, inf
        %v374 = vsel %vm373, %v365, %v372
        %vm375 = vcmp.eq.f32.partialorder %v365, 0.0
        %v376 = vand.u32 %v365, 2147483648
        %v377 = vsel %vm375, %v376, %v374
        %v378 = vadd.f32 %v377, 1e-06
        %v379 = vrcp.pop %v378
        %v380 = vmul.f32 %v378, %v379
        %v381 = vsub.f32 1.0, %v380
        %v382 = vmul.f32 %v379, %v381
        %v383 = vadd.f32 %v379, %v382
        %vm384 = vweird.f32 %v378
        %vm385 = vweird.f32 %v379
        %vm386 = vmor %vm384, %vm385
        %v387 = vsel %vm386, %v379, %v383
        %v388 = vand.u32 2147483647, %v378
        %vm389 = vcmp.eq.f32.partialorder %v388, 8.507059e+37
        %v390 = vand.u32 %v378, 2147483648
        %v391 = vor.u32 1.1754944e-38, %v390
        %v392 = vsel %vm389, %v391, %v387
        %v393 = vmul.f32 %v358, %v392
        %v394 = vperm.slane %v353, 0
        %v395 = vmul.f32 %v394, %v393
        %v396 = vperm.slane %v354, 0
        %v397 = vadd.f32 %v395, %v396
        %398 = vst [vmem:[%s216] sm:$0xff] %v397
        %s399 = sand.u32 %s97, 1
        %s400 = scalar_lea.sflag [#allocation4], %s399
        %s401 = sand.u32 %s97, 1
        %s402 = smul.addr %s401, 8
        %s403 = scalar_lea.vmem [#allocation8], %s402
        // Predicated region
        $region45: #{tpu_custom_call.1} parent=31 // pred_check
          %p404 = pneg %p107
        $region46: #{tpu_custom_call.1} parent=31 // pred_check_branch
          %406 = sbr.rel (%p404) target = $region48
        $region47: #{tpu_custom_call.1} parent=31 // pred_region
          %408 = vsyncadd %s400, 0
          %s409 = smul.addr %s21, 8
          %s410 = scalar_lea.hbm %s3, %s409
          %s412 = sshll.u32 %s403, 4
          %s413 = int_to_ptr.vmem [resolvable:$true] %s412
          %s414 = sshll.u32 %s410, 4
          %s415 = int_to_ptr.hbm [resolvable:$true] %s414
          %417 = dma.vmem_to_hbm [thread:$0]  %s413, 128, %s415, %s400
        $region48: #{tpu_custom_call.1} parent=31 // pred_fallthru
          _
      $region32: #{tpu_custom_call.1} parent=5 // pred_fallthru
        _
      %p418 = scmp.le.s32.totalorder 2, %s16
      // Predicated region
      $region49: #{tpu_custom_call.1} parent=5 // pred_check
        %p419 = pneg %p418
      $region50: #{tpu_custom_call.1} parent=5 // pred_check_branch
        %421 = sbr.rel (%p419) target = $region52
      $region51: #{tpu_custom_call.1} parent=5 // pred_region
        %s422 = ssub.s32 %s16, 2
        // Predicated region
        $region53: #{tpu_custom_call.1} parent=51 // pred_check
          %p423 = pneg %p113
        $region54: #{tpu_custom_call.1} parent=51 // pred_check_branch
          %425 = sbr.rel (%p423) target = $region56
        $region55: #{tpu_custom_call.1} parent=51 // pred_region
          %s426 = sand.u32 %s98, 1
          %s427 = scalar_lea.sflag [#allocation4], %s426
          %s428 = sand.u32 %s98, 1
          %s429 = smul.addr %s428, 8
          %s430 = scalar_lea.vmem [#allocation8], %s429
          %432 = dma.done %s427, 128
        $region56: #{tpu_custom_call.1} parent=51 // pred_fallthru
          _
      $region52: #{tpu_custom_call.1} parent=5 // pred_fallthru
        _
    $region6: #{tpu_custom_call.1} parent=1 // loop_footer
      %s20 = sadd.s32 1, %s16
    $region7: #{tpu_custom_call.1} parent=1 // loop_footer_branch
      %15 = sbr.rel target = $region3
    $region8: #{tpu_custom_call.1} parent=1 // loop_exit
      _
    %433 = vsyncpa [#allocation3], 1
    %s434 = scalar_lea.sflag [#allocation3], 1
    %435 = vsyncpa %s434, 1
    %436 = vsyncpa [#allocation6], 1
    %437 = vsyncpa [#allocation4], 1
    %s438 = scalar_lea.sflag [#allocation4], 1
    %439 = vsyncpa %s438, 1

</llo_original>
